<compile_context>
chip_gen: v6e
topology: v6e:2x2x1
jax: 0.10.0
libtpu: 0.0.40
codegen_flags: <defaults>
</compile_context>

<pallas_src>
import math

import jax
import jax.numpy as jnp
from jax import lax
from jax.experimental import pallas as pl
from jax.experimental.pallas import tpu as pltpu


def _ufln_fused_kernel(x_ref, adj_ref, w123_ref, b123_ref,
                       w45_ref, b45_ref, wl_ref, bl_ref, out_ref):
    """One grid step == one UFLN branch (x or y). Leading block dim is 1."""
    x = x_ref[0]          # [N, nfeat]
    adj = adj_ref[0]      # [N, N]

    d123 = w123_ref.shape[1]          # 3f + 12 (static)
    f = (d123 - 12) // 3              # static python int

    # Fused gc1|gc2|gc3: one x@W, one adj@support, one bias, one sigmoid.
    h = jnp.dot(x, w123_ref[...], preferred_element_type=jnp.float32)
    h = jnp.dot(adj, h, preferred_element_type=jnp.float32) + b123_ref[...]
    h = jax.nn.sigmoid(h)             # [N, 3f+12] = [x_fir | x_sec | x_thi]

    x_sec = h[:, f:2 * f + 4]         # [N, f+4]
    # AdaptiveAvgPool1d(1) on a 2-D tensor == mean over the feature axis.
    sec_mean = jnp.mean(x_sec, axis=1, keepdims=True)          # [N, 1]

    # low = [ x_fir | x_sec | mean(x_sec) * x_thi ]  — built with a per-column
    # select instead of a lane concat (first 2f+4 cols scaled by 1.0).
    col = lax.broadcasted_iota(jnp.int32, h.shape, 1)
    scale = jnp.where(col < 2 * f + 4, jnp.float32(1.0), sec_mean)
    low = h * scale                                             # [N, 3f+12]

    # Fused gc4|gc5 (no activation).
    h45 = jnp.dot(low, w45_ref[...], preferred_element_type=jnp.float32)
    h45 = jnp.dot(adj, h45, preferred_element_type=jnp.float32) + b45_ref[...]
    x_fou = h45[:, :2 * f + 4]        # [N, 2f+4]
    x_fiv = h45[:, 2 * f + 4:]        # [N, 2f]

    # nn.Linear(2f -> 2f+4) followed by LeakyReLU(negative_slope=0.01).
    pre = jnp.dot(x_fiv, wl_ref[...],
                  preferred_element_type=jnp.float32) + bl_ref[...]
    x_mlp = jnp.where(pre >= 0, pre, 0.01 * pre)                # [N, 2f+4]

    x_f3 = (x_mlp + x_fou) * 0.5                                # [N, 2f+4]
    x_low = jnp.mean(low, axis=1, keepdims=True) * low + low    # [N, 3f+12]

    # Lane-dense packed output: [ low | final(=x_low|x_f3) | fiv | mlp ]
    # widths: (3f+12) + (5f+16) + 2f + (2f+4) = 12f+32  (== 128 for f=8).
    packed = jnp.concatenate([low, x_low, x_f3, x_fiv, x_mlp], axis=1)
    pad = out_ref.shape[2] - packed.shape[1]        # static; 0 for feature=8
    if pad > 0:
        packed = jnp.concatenate(
            [packed, jnp.zeros((packed.shape[0], pad), jnp.float32)], axis=1)
    out_ref[0] = packed


def fuse_params(params):
    """Pre-concatenate shared-input GCN weights once (not per call)."""
    return {
        "w123": jnp.concatenate([params["w1"], params["w2"], params["w3"]], axis=1),
        "b123": jnp.concatenate([params["b1"], params["b2"], params["b3"]], axis=1),
        "w45": jnp.concatenate([params["w4"], params["w5"]], axis=1),
        "b45": jnp.concatenate([params["b4"], params["b5"]], axis=1),
        "wl": params["wl"],
        "bl": params["bl"],
    }


def ufln_forward(fused, x, adj1, y, adj2):
    """Mirrors UFLN.forward's 8-tuple output ordering, single pallas_call."""
    n, nfeat = x.shape
    d123 = fused["w123"].shape[1]
    f = (d123 - 12) // 3
    d_low = 3 * f + 12
    d45 = 4 * f + 4
    d_mid = 2 * f + 4
    d_final = d_low + d_mid
    d_pack = d_low + d_final + 2 * f + d_mid          # == 128 for f == 8
    d_pack_pad = d_pack + ((-d_pack) % 128)           # lane-dense output width

    xs = jnp.stack([x, y])            # [2, N, nfeat]
    adjs = jnp.stack([adj1, adj2])    # [2, N, N]

    const2 = lambda b: (0, 0)         # weights resident: same block every step
    packed = pl.pallas_call(
        _ufln_fused_kernel,
        out_shape=jax.ShapeDtypeStruct((2, n, d_pack_pad), jnp.float32),
        grid_spec=pltpu.PrefetchScalarGridSpec(
            num_scalar_prefetch=0,
            grid=(2,),
            in_specs=[
                pl.BlockSpec((1, n, nfeat), lambda b: (b, 0, 0)),
                pl.BlockSpec((1, n, n), lambda b: (b, 0, 0)),
                pl.BlockSpec((nfeat, d123), const2),
                pl.BlockSpec((1, d123), const2),
                pl.BlockSpec((d_low, d45), const2),
                pl.BlockSpec((1, d45), const2),
                pl.BlockSpec((2 * f, d_mid), const2),
                pl.BlockSpec((1, d_mid), const2),
            ],
            out_specs=pl.BlockSpec((1, n, d_pack_pad), lambda b: (b, 0, 0)),
        ),
        compiler_params=pltpu.CompilerParams(
            dimension_semantics=("parallel",)),
    )(xs, adjs, fused["w123"], fused["b123"], fused["w45"], fused["b45"],
      fused["wl"], fused["bl"])

    o0 = d_low
    o1 = o0 + d_final
    o2 = o1 + 2 * f
    o3 = o2 + d_mid
    x_low, y_low = packed[0, :, :o0], packed[1, :, :o0]
    x_final, y_final = packed[0, :, o0:o1], packed[1, :, o0:o1]
    x_fiv, y_fiv = packed[0, :, o1:o2], packed[1, :, o1:o2]
    x_mlp, y_mlp = packed[0, :, o2:o3], packed[1, :, o2:o3]
    return (x_low, y_low, x_final, y_final, x_fiv, x_mlp, y_fiv, y_mlp)


def init_params(key, nfeat, feature):
    """Deterministic synthetic init, matching the PyTorch parameter shapes."""
    f = feature
    f1, f2 = f + 4, f + 8
    d_low = f + f1 + f2            # in_features of gc4 / gc5
    gcn_dims = {
        "1": (nfeat, f),
        "2": (nfeat, f1),
        "3": (nfeat, f2),
        "4": (d_low, 2 * f + 4),
        "5": (d_low, 2 * f),
    }
    params = {}
    for name, (din, dout) in gcn_dims.items():
        stdv = 1.0 / math.sqrt(dout)           # GraphConvolution.reset_parameters
        key, kw, kb = jax.random.split(key, 3)
        params[f"w{name}"] = jax.random.uniform(kw, (din, dout), jnp.float32,
                                                -stdv, stdv)
        params[f"b{name}"] = jax.random.uniform(kb, (1, dout), jnp.float32,
                                                -stdv, stdv)
    # nn.Linear(2f, 2f+4): stored directly as [in, out]
    din, dout = 2 * f, 2 * f + 4
    bound = 1.0 / math.sqrt(din)
    key, kw, kb = jax.random.split(key, 3)
    params["wl"] = jax.random.uniform(kw, (din, dout), jnp.float32, -bound, bound)
    params["bl"] = jax.random.uniform(kb, (1, dout), jnp.float32, -bound, bound)
    return params


def _branch_ref(params, x, adj):
    """Plain-JAX reference (semantics copied from the PyTorch forward)."""
    def gcn(inp, w, b):
        return adj @ (inp @ w) + b
    x_fir = jax.nn.sigmoid(gcn(x, params["w1"], params["b1"]))
    x_sec = jax.nn.sigmoid(gcn(x, params["w2"], params["b2"]))
    x_thi = jax.nn.sigmoid(gcn(x, params["w3"], params["b3"]))
    x_f1 = jnp.concatenate([x_fir, x_sec], 1)
    x_f2 = jnp.mean(x_sec, 1, keepdims=True) * x_thi
    low = jnp.concatenate([x_f1, x_f2], 1)
    x_fou = gcn(low, params["w4"], params["b4"])
    x_fiv = gcn(low, params["w5"], params["b5"])
    pre = x_fiv @ params["wl"] + params["bl"]
    x_mlp = jnp.where(pre >= 0, pre, 0.01 * pre)
    x_f3 = (x_mlp + x_fou) / 2
    x_low = jnp.mean(low, 1, keepdims=True) * low + low
    final = jnp.concatenate([x_low, x_f3], 1)
    return low, final, x_fiv, x_mlp


if __name__ == "__main__":
    N, NFEAT, FEATURE = 8, 16, 8   # 8 nodes, 16 input feats, feature=8

    params = init_params(jax.random.PRNGKey(0), NFEAT, FEATURE)
    fused = fuse_params(params)

    kx, ka1, ky, ka2 = jax.random.split(jax.random.PRNGKey(0), 4)
    x = jax.random.normal(kx, (N, NFEAT), jnp.float32)
    y = jax.random.normal(ky, (N, NFEAT), jnp.float32)

    def make_adj(k):
        a = jax.random.uniform(k, (N, N), jnp.float32) + jnp.eye(N, dtype=jnp.float32)
        return a / jnp.sum(a, axis=1, keepdims=True)   # dense row-normalized adjacency

    adj1 = make_adj(ka1)
    adj2 = make_adj(ka2)

    fwd = jax.jit(ufln_forward)
    outs = jax.block_until_ready(fwd(fused, x, adj1, y, adj2))

    # Sanity-check against the plain-JAX reference.
    rx = _branch_ref(params, x, adj1)
    ry = _branch_ref(params, y, adj2)
    refs = (rx[0], ry[0], rx[1], ry[1], rx[2], rx[3], ry[2], ry[3])
    for o, r in zip(outs, refs):
        assert o.shape == r.shape, (o.shape, r.shape)
        assert jnp.allclose(o, r, atol=1e-4, rtol=1e-4), \
            float(jnp.max(jnp.abs(o - r)))

    print("KERNEL_OK")
</pallas_src>

<mosaic_0001>
module attributes {stable_mosaic.version = 11 : i64} {
  func.func @_ufln_fused_kernel(%arg0: i32, %arg1: memref<1x8x16xf32, #tpu.memory_space<vmem>>, %arg2: memref<1x8x8xf32, #tpu.memory_space<vmem>>, %arg3: memref<16x36xf32, #tpu.memory_space<vmem>>, %arg4: memref<1x36xf32, #tpu.memory_space<vmem>>, %arg5: memref<36x36xf32, #tpu.memory_space<vmem>>, %arg6: memref<1x36xf32, #tpu.memory_space<vmem>>, %arg7: memref<16x20xf32, #tpu.memory_space<vmem>>, %arg8: memref<1x20xf32, #tpu.memory_space<vmem>>, %arg9: memref<1x8x128xf32, #tpu.memory_space<vmem>>) attributes {dimension_semantics = [#tpu.dimension_semantics<parallel>], iteration_bounds = array<i64: 2>, scalar_prefetch = 0 : i64, scratch_operands = 0 : i64, tpu.core_type = #tpu.core_type<tc>, window_params = [{transform_indices = @transform_0, window_bounds = array<i64: 1, 8, 16>}, {transform_indices = @transform_1, window_bounds = array<i64: 1, 8, 8>}, {pipeline_mode = #tpu.pipeline_mode<synchronous>, transform_indices = @transform_2, window_bounds = array<i64: 16, 36>}, {pipeline_mode = #tpu.pipeline_mode<synchronous>, transform_indices = @transform_3, window_bounds = array<i64: 1, 36>}, {pipeline_mode = #tpu.pipeline_mode<synchronous>, transform_indices = @transform_4, window_bounds = array<i64: 36, 36>}, {pipeline_mode = #tpu.pipeline_mode<synchronous>, transform_indices = @transform_5, window_bounds = array<i64: 1, 36>}, {pipeline_mode = #tpu.pipeline_mode<synchronous>, transform_indices = @transform_6, window_bounds = array<i64: 16, 20>}, {pipeline_mode = #tpu.pipeline_mode<synchronous>, transform_indices = @transform_7, window_bounds = array<i64: 1, 20>}, {transform_indices = @transform_8, window_bounds = array<i64: 1, 8, 128>}]} {
    %c0 = arith.constant 0 : index
    %c0_0 = arith.constant 0 : index
    %c0_1 = arith.constant 0 : index
    %0 = vector.load %arg1[%c0, %c0_0, %c0_1] : memref<1x8x16xf32, #tpu.memory_space<vmem>>, vector<1x8x16xf32>
    %1 = vector.shape_cast %0 : vector<1x8x16xf32> to vector<8x16xf32>
    %c0_2 = arith.constant 0 : index
    %c0_3 = arith.constant 0 : index
    %c0_4 = arith.constant 0 : index
    %2 = vector.load %arg2[%c0_2, %c0_3, %c0_4] : memref<1x8x8xf32, #tpu.memory_space<vmem>>, vector<1x8x8xf32>
    %3 = vector.shape_cast %2 : vector<1x8x8xf32> to vector<8x8xf32>
    %c0_5 = arith.constant 0 : index
    %c0_6 = arith.constant 0 : index
    %4 = vector.load %arg3[%c0_5, %c0_6] : memref<16x36xf32, #tpu.memory_space<vmem>>, vector<16x36xf32>
    %cst = arith.constant dense<0.000000e+00> : vector<8x36xf32>
    %5 = tpu.matmul %1, %4, %cst {dimension_numbers = #tpu.dot_dimension_numbers<[1], [0], [0], [1], [0, 0, 1, 1], [], []>} : vector<8x16xf32>, vector<16x36xf32>, vector<8x36xf32> -> vector<8x36xf32>
    %cst_7 = arith.constant dense<0.000000e+00> : vector<8x36xf32>
    %6 = tpu.matmul %3, %5, %cst_7 {dimension_numbers = #tpu.dot_dimension_numbers<[1], [0], [0], [1], [0, 0, 1, 1], [], []>} : vector<8x8xf32>, vector<8x36xf32>, vector<8x36xf32> -> vector<8x36xf32>
    %c0_8 = arith.constant 0 : index
    %c0_9 = arith.constant 0 : index
    %7 = vector.load %arg4[%c0_8, %c0_9] : memref<1x36xf32, #tpu.memory_space<vmem>>, vector<1x36xf32>
    %8 = vector.broadcast %7 : vector<1x36xf32> to vector<8x36xf32>
    %9 = arith.addf %6, %8 : vector<8x36xf32>
    %10 = arith.negf %9 : vector<8x36xf32>
    %11 = math.exp %10 : vector<8x36xf32>
    %cst_10 = arith.constant 1.000000e+00 : f32
    %12 = vector.broadcast %cst_10 : f32 to vector<8x36xf32>
    %13 = arith.addf %12, %11 : vector<8x36xf32>
    %14 = arith.divf %12, %13 : vector<8x36xf32>
    %15 = vector.extract_strided_slice %14 {offsets = [0, 8], sizes = [8, 12], strides = [1, 1]} : vector<8x36xf32> to vector<8x12xf32>
    %cst_11 = arith.constant dense<0.000000e+00> : vector<8xf32>
    %16 = vector.multi_reduction <add>, %15, %cst_11 [1] : vector<8x12xf32> to vector<8xf32>
    %17 = vector.shape_cast %16 : vector<8xf32> to vector<8x1xf32>
    %cst_12 = arith.constant 1.200000e+01 : f32
    %18 = vector.broadcast %cst_12 : f32 to vector<8x1xf32>
    %19 = arith.divf %17, %18 : vector<8x1xf32>
    %20 = tpu.iota {dimensions = array<i32: 1>} : vector<8x36xi32>
    %c20_i32 = arith.constant 20 : i32
    %21 = vector.broadcast %c20_i32 : i32 to vector<8x36xi32>
    %22 = arith.cmpi slt, %20, %21 : vector<8x36xi32>
    %cst_13 = arith.constant 1.000000e+00 : f32
    %23 = vector.broadcast %cst_13 : f32 to vector<8x36xf32>
    %24 = vector.shape_cast %19 : vector<8x1xf32> to vector<8x1xf32>
    %25 = vector.broadcast %24 : vector<8x1xf32> to vector<8x36xf32>
    %26 = arith.select %22, %23, %25 : vector<8x36xi1>, vector<8x36xf32>
    %27 = arith.mulf %14, %26 : vector<8x36xf32>
    %c0_14 = arith.constant 0 : index
    %c0_15 = arith.constant 0 : index
    %28 = vector.load %arg5[%c0_14, %c0_15] : memref<36x36xf32, #tpu.memory_space<vmem>>, vector<36x36xf32>
    %cst_16 = arith.constant dense<0.000000e+00> : vector<8x36xf32>
    %29 = tpu.matmul %27, %28, %cst_16 {dimension_numbers = #tpu.dot_dimension_numbers<[1], [0], [0], [1], [0, 0, 1, 1], [], []>} : vector<8x36xf32>, vector<36x36xf32>, vector<8x36xf32> -> vector<8x36xf32>
    %cst_17 = arith.constant dense<0.000000e+00> : vector<8x36xf32>
    %30 = tpu.matmul %3, %29, %cst_17 {dimension_numbers = #tpu.dot_dimension_numbers<[1], [0], [0], [1], [0, 0, 1, 1], [], []>} : vector<8x8xf32>, vector<8x36xf32>, vector<8x36xf32> -> vector<8x36xf32>
    %c0_18 = arith.constant 0 : index
    %c0_19 = arith.constant 0 : index
    %31 = vector.load %arg6[%c0_18, %c0_19] : memref<1x36xf32, #tpu.memory_space<vmem>>, vector<1x36xf32>
    %32 = vector.broadcast %31 : vector<1x36xf32> to vector<8x36xf32>
    %33 = arith.addf %30, %32 : vector<8x36xf32>
    %34 = vector.extract_strided_slice %33 {offsets = [0, 0], sizes = [8, 20], strides = [1, 1]} : vector<8x36xf32> to vector<8x20xf32>
    %35 = vector.extract_strided_slice %33 {offsets = [0, 20], sizes = [8, 16], strides = [1, 1]} : vector<8x36xf32> to vector<8x16xf32>
    %c0_20 = arith.constant 0 : index
    %c0_21 = arith.constant 0 : index
    %36 = vector.load %arg7[%c0_20, %c0_21] : memref<16x20xf32, #tpu.memory_space<vmem>>, vector<16x20xf32>
    %cst_22 = arith.constant dense<0.000000e+00> : vector<8x20xf32>
    %37 = tpu.matmul %35, %36, %cst_22 {dimension_numbers = #tpu.dot_dimension_numbers<[1], [0], [0], [1], [0, 0, 1, 1], [], []>} : vector<8x16xf32>, vector<16x20xf32>, vector<8x20xf32> -> vector<8x20xf32>
    %c0_23 = arith.constant 0 : index
    %c0_24 = arith.constant 0 : index
    %38 = vector.load %arg8[%c0_23, %c0_24] : memref<1x20xf32, #tpu.memory_space<vmem>>, vector<1x20xf32>
    %39 = vector.broadcast %38 : vector<1x20xf32> to vector<8x20xf32>
    %40 = arith.addf %37, %39 : vector<8x20xf32>
    %cst_25 = arith.constant 0.000000e+00 : f32
    %41 = vector.broadcast %cst_25 : f32 to vector<8x20xf32>
    %42 = arith.cmpf oge, %40, %41 : vector<8x20xf32>
    %cst_26 = arith.constant 0.00999999977 : f32
    %43 = vector.broadcast %cst_26 : f32 to vector<8x20xf32>
    %44 = arith.mulf %43, %40 : vector<8x20xf32>
    %45 = arith.select %42, %40, %44 : vector<8x20xi1>, vector<8x20xf32>
    %46 = arith.addf %45, %34 : vector<8x20xf32>
    %cst_27 = arith.constant 5.000000e-01 : f32
    %47 = vector.broadcast %cst_27 : f32 to vector<8x20xf32>
    %48 = arith.mulf %46, %47 : vector<8x20xf32>
    %cst_28 = arith.constant dense<0.000000e+00> : vector<8xf32>
    %49 = vector.multi_reduction <add>, %27, %cst_28 [1] : vector<8x36xf32> to vector<8xf32>
    %50 = vector.shape_cast %49 : vector<8xf32> to vector<8x1xf32>
    %cst_29 = arith.constant 3.600000e+01 : f32
    %51 = vector.broadcast %cst_29 : f32 to vector<8x1xf32>
    %52 = arith.divf %50, %51 : vector<8x1xf32>
    %53 = vector.broadcast %52 : vector<8x1xf32> to vector<8x36xf32>
    %54 = arith.mulf %53, %27 : vector<8x36xf32>
    %55 = arith.addf %54, %27 : vector<8x36xf32>
    %56 = tpu.concatenate %27, %55, %48, %35, %45 in 1 : vector<8x36xf32>, vector<8x36xf32>, vector<8x20xf32>, vector<8x16xf32>, vector<8x20xf32> -> vector<8x128xf32>
    %c0_30 = arith.constant 0 : index
    %c0_31 = arith.constant 0 : index
    %c0_32 = arith.constant 0 : index
    %57 = vector.load %arg9[%c0_30, %c0_31, %c0_32] : memref<1x8x128xf32, #tpu.memory_space<vmem>>, vector<1x8x128xf32>
    %58 = vector.shape_cast %57 : vector<1x8x128xf32> to vector<8x128xf32>
    %59 = vector.shape_cast %56 : vector<8x128xf32> to vector<1x8x128xf32>
    tpu.vector_store %arg9[%c0_30, %c0_31, %c0_32], %59 {strides = array<i32>} : memref<1x8x128xf32, #tpu.memory_space<vmem>>, vector<1x8x128xf32>,
    return
  }
  func.func @transform_0(%arg0: i32) -> (i32, i32, i32) {
    %c0_i32 = arith.constant 0 : i32
    %c0_i32_0 = arith.constant 0 : i32
    %c0_i32_1 = arith.constant 0 : i32
    return %arg0, %c0_i32, %c0_i32_0 : i32, i32, i32
  }
  func.func @transform_1(%arg0: i32) -> (i32, i32, i32) {
    %c0_i32 = arith.constant 0 : i32
    %c0_i32_0 = arith.constant 0 : i32
    %c0_i32_1 = arith.constant 0 : i32
    return %arg0, %c0_i32, %c0_i32_0 : i32, i32, i32
  }
  func.func @transform_2(%arg0: i32) -> (i32, i32) {
    %c0_i32 = arith.constant 0 : i32
    %c0_i32_0 = arith.constant 0 : i32
    %c0_i32_1 = arith.constant 0 : i32
    return %c0_i32, %c0_i32_0 : i32, i32
  }
  func.func @transform_3(%arg0: i32) -> (i32, i32) {
    %c0_i32 = arith.constant 0 : i32
    %c0_i32_0 = arith.constant 0 : i32
    %c0_i32_1 = arith.constant 0 : i32
    return %c0_i32, %c0_i32_0 : i32, i32
  }
  func.func @transform_4(%arg0: i32) -> (i32, i32) {
    %c0_i32 = arith.constant 0 : i32
    %c0_i32_0 = arith.constant 0 : i32
    %c0_i32_1 = arith.constant 0 : i32
    return %c0_i32, %c0_i32_0 : i32, i32
  }
  func.func @transform_5(%arg0: i32) -> (i32, i32) {
    %c0_i32 = arith.constant 0 : i32
    %c0_i32_0 = arith.constant 0 : i32
    %c0_i32_1 = arith.constant 0 : i32
    return %c0_i32, %c0_i32_0 : i32, i32
  }
  func.func @transform_6(%arg0: i32) -> (i32, i32) {
    %c0_i32 = arith.constant 0 : i32
    %c0_i32_0 = arith.constant 0 : i32
    %c0_i32_1 = arith.constant 0 : i32
    return %c0_i32, %c0_i32_0 : i32, i32
  }
  func.func @transform_7(%arg0: i32) -> (i32, i32) {
    %c0_i32 = arith.constant 0 : i32
    %c0_i32_0 = arith.constant 0 : i32
    %c0_i32_1 = arith.constant 0 : i32
    return %c0_i32, %c0_i32_0 : i32, i32
  }
  func.func @transform_8(%arg0: i32) -> (i32, i32, i32) {
    %c0_i32 = arith.constant 0 : i32
    %c0_i32_0 = arith.constant 0 : i32
    %c0_i32_1 = arith.constant 0 : i32
    return %arg0, %c0_i32, %c0_i32_0 : i32, i32, i32
  }
}

</mosaic_0001>

<llo_original>
// kernel: ufln_forward.1
$region0: #{ufln_forward.1}
  #allocation0 [shape = 'u32[]', space=smem, size = 0x4, offset = 0x4, fixed_abs, tag = 'smem constant byte address 0x4 - core index']
  #allocation1 [shape = 'u32[144,128]{1,0:T(1,128)}', space=vmem, size = 0x12000, scoped, tag = 'internal scratch']
  %s0 = inlined_call_operand.vmem [shape: f32[2,8,16], index: 0, kind: input, shape index: {}]
  %s1 = inlined_call_operand.vmem [shape: f32[2,8,8], index: 1, kind: input, shape index: {}]
  %s2 = inlined_call_operand.vmem [shape: f32[16,36], index: 2, kind: input, shape index: {}]
  %s3 = inlined_call_operand.hbm [shape: f32[1,36], index: 3, kind: input, shape index: {}]
  %s4 = inlined_call_operand.vmem [shape: f32[36,36], index: 4, kind: input, shape index: {}]
  %s5 = inlined_call_operand.hbm [shape: f32[1,36], index: 5, kind: input, shape index: {}]
  %s6 = inlined_call_operand.vmem [shape: f32[16,20], index: 6, kind: input, shape index: {}]
  %s7 = inlined_call_operand.hbm [shape: f32[1,20], index: 7, kind: input, shape index: {}]
  %s8 = inlined_call_operand.vmem [shape: f32[2,8,128], index: 8, kind: output, shape index: {}]
  %s9 = sld [smem:[#allocation0]]
  $region77: #{ufln_forward.1} parent=0
    _
  %s11 = ssub.s32 1, %s9
  %s12 = scalar_select 0, %s11, %s9
  $region1: #{ufln_forward.1} parent=0
    #allocation2 [shape = 'u8[512]{0}', space=vmem, size = 0x400, scoped, tag = 'input window, operand 3, single buffered']
    #allocation3 [shape = 's32[2]{0}', space=sflag, size = 0x8, scoped, tag = 'scoped memory for ufln_forward.1']
    #allocation4 [shape = 'u8[512]{0}', space=vmem, size = 0x400, scoped, tag = 'input window, operand 5, single buffered']
    #allocation5 [shape = 's32[1]{0}', space=sflag, size = 0x4, scoped, tag = 'scoped memory for ufln_forward.1']
    #allocation6 [shape = 'u8[512]{0}', space=vmem, size = 0x400, scoped, tag = 'input window, operand 7, single buffered']
    %13 = vsyncpa [#allocation3], 0
    %14 = vsyncpa [#allocation5], 0
    loop: start=0, step=1, limit=4
    $region2: #{ufln_forward.1} parent=1 // loop_pre_header
      _
    $region3: #{ufln_forward.1} parent=1 // loop_header
      %s16 = sphi 0, %s20
      %p17 = scmp.ge.s32.totalorder %s16, 4
      %s26 = sphi 0, %s28
      %s29 = sphi 0, %s26
      %s30 = sphi 0, %s29
      %s46 = sphi 0, %s30
      %s52 = sphi 0, %s54
      %s55 = sphi 0, %s52
      %s56 = sphi 0, %s55
      %s72 = sphi 0, %s56
      %s76 = sphi 0, %s76
      %s78 = sphi 0, %s76
      %s79 = sphi 0, %s78
      %s93 = sphi 0, %s79
      %s97 = sphi 0, %s97
      %s99 = sphi 0, %s97
      %s100 = sphi 0, %s99
      %s114 = sphi 0, %s100
      %s118 = sphi 0, %s118
      %s120 = sphi 0, %s118
      %s121 = sphi 0, %s120
      %s135 = sphi 0, %s121
      %s139 = sphi 0, %s139
      %s141 = sphi 0, %s139
      %s142 = sphi 0, %s141
      %s156 = sphi 0, %s142
      %s160 = sphi 0, %s160
      %s162 = sphi 0, %s160
      %s163 = sphi 0, %s162
      %s177 = sphi 0, %s163
      %s181 = sphi 0, %s181
      %s183 = sphi 0, %s181
      %s184 = sphi 0, %s183
      %s198 = sphi 0, %s184
      %s204 = sphi 0, %s206
      %s207 = sphi 0, %s204
      %s208 = sphi 0, %s207
      %s224 = sphi 0, %s208
    $region4: #{ufln_forward.1} parent=1 // loop_header_branch
      %19 = sbr.rel (%p17) target = $region8
    $region5: #{ufln_forward.1} parent=1 // loop_body
      %s21 = ssub.s32 %s16, 1
      %s22 = ssub.s32 %s16, 2
      %s23 = sadd.s32 %s16, 1
      %s24 = ssub.s32 %s16, %s23
      %p25 = scmp.eq.s32.totalorder %s24, 0
      %s27 = sadd.s32 %s26, 1
      %s28 = scalar_select %p25, %s26, %s27
      %p31 = pneg %p25
      %p32 = scmp.eq.s32.totalorder %s16, 1
      %p33 = por %p31, %p32
      %p34 = scmp.ne.s32.totalorder %s26, %s29
      %p35 = scmp.eq.s32.totalorder %s16, 0
      %p36 = por %p34, %p35
      %p37 = scmp.ne.s32.totalorder %s26, %s29
      %p38 = scmp.eq.s32.totalorder %s21, 1
      %p39 = por %p37, %p38
      %p40 = scmp.ne.s32.totalorder %s29, %s30
      %p41 = scmp.eq.s32.totalorder %s21, 0
      %p42 = por %p40, %p41
      %p43 = scmp.ne.s32.totalorder %s29, %s30
      %p44 = scmp.eq.s32.totalorder %s22, 1
      %p45 = por %p43, %p44
      %p47 = scmp.ne.s32.totalorder %s30, %s46
      %p48 = scmp.eq.s32.totalorder %s22, 0
      %p49 = por %p47, %p48
      %s50 = ssub.s32 %s16, %s23
      %p51 = scmp.eq.s32.totalorder %s50, 0
      %s53 = sadd.s32 %s52, 1
      %s54 = scalar_select %p51, %s52, %s53
      %p57 = pneg %p51
      %p58 = scmp.eq.s32.totalorder %s16, 1
      %p59 = por %p57, %p58
      %p60 = scmp.ne.s32.totalorder %s52, %s55
      %p61 = scmp.eq.s32.totalorder %s16, 0
      %p62 = por %p60, %p61
      %p63 = scmp.ne.s32.totalorder %s52, %s55
      %p64 = scmp.eq.s32.totalorder %s21, 1
      %p65 = por %p63, %p64
      %p66 = scmp.ne.s32.totalorder %s55, %s56
      %p67 = scmp.eq.s32.totalorder %s21, 0
      %p68 = por %p66, %p67
      %p69 = scmp.ne.s32.totalorder %s55, %s56
      %p70 = scmp.eq.s32.totalorder %s22, 1
      %p71 = por %p69, %p70
      %p73 = scmp.ne.s32.totalorder %s56, %s72
      %p74 = scmp.eq.s32.totalorder %s22, 0
      %p75 = por %p73, %p74
      %s77 = sadd.s32 %s76, 1
      %p80 = scmp.eq.s32.totalorder %s16, 1
      %p81 = scmp.ne.s32.totalorder %s76, %s78
      %p82 = scmp.eq.s32.totalorder %s16, 0
      %p83 = por %p81, %p82
      %p84 = scmp.ne.s32.totalorder %s76, %s78
      %p85 = scmp.eq.s32.totalorder %s21, 1
      %p86 = por %p84, %p85
      %p87 = scmp.ne.s32.totalorder %s78, %s79
      %p88 = scmp.eq.s32.totalorder %s21, 0
      %p89 = por %p87, %p88
      %p90 = scmp.ne.s32.totalorder %s78, %s79
      %p91 = scmp.eq.s32.totalorder %s22, 1
      %p92 = por %p90, %p91
      %p94 = scmp.ne.s32.totalorder %s79, %s93
      %p95 = scmp.eq.s32.totalorder %s22, 0
      %p96 = por %p94, %p95
      %s98 = sadd.s32 %s97, 1
      %p101 = scmp.eq.s32.totalorder %s16, 1
      %p102 = scmp.ne.s32.totalorder %s97, %s99
      %p103 = scmp.eq.s32.totalorder %s16, 0
      %p104 = por %p102, %p103
      %p105 = scmp.ne.s32.totalorder %s97, %s99
      %p106 = scmp.eq.s32.totalorder %s21, 1
      %p107 = por %p105, %p106
      %p108 = scmp.ne.s32.totalorder %s99, %s100
      %p109 = scmp.eq.s32.totalorder %s21, 0
      %p110 = por %p108, %p109
      %p111 = scmp.ne.s32.totalorder %s99, %s100
      %p112 = scmp.eq.s32.totalorder %s22, 1
      %p113 = por %p111, %p112
      %p115 = scmp.ne.s32.totalorder %s100, %s114
      %p116 = scmp.eq.s32.totalorder %s22, 0
      %p117 = por %p115, %p116
      %s119 = sadd.s32 %s118, 1
      %p122 = scmp.eq.s32.totalorder %s16, 1
      %p123 = scmp.ne.s32.totalorder %s118, %s120
      %p124 = scmp.eq.s32.totalorder %s16, 0
      %p125 = por %p123, %p124
      %p126 = scmp.ne.s32.totalorder %s118, %s120
      %p127 = scmp.eq.s32.totalorder %s21, 1
      %p128 = por %p126, %p127
      %p129 = scmp.ne.s32.totalorder %s120, %s121
      %p130 = scmp.eq.s32.totalorder %s21, 0
      %p131 = por %p129, %p130
      %p132 = scmp.ne.s32.totalorder %s120, %s121
      %p133 = scmp.eq.s32.totalorder %s22, 1
      %p134 = por %p132, %p133
      %p136 = scmp.ne.s32.totalorder %s121, %s135
      %p137 = scmp.eq.s32.totalorder %s22, 0
      %p138 = por %p136, %p137
      %s140 = sadd.s32 %s139, 1
      %p143 = scmp.eq.s32.totalorder %s16, 1
      %p144 = scmp.ne.s32.totalorder %s139, %s141
      %p145 = scmp.eq.s32.totalorder %s16, 0
      %p146 = por %p144, %p145
      %p147 = scmp.ne.s32.totalorder %s139, %s141
      %p148 = scmp.eq.s32.totalorder %s21, 1
      %p149 = por %p147, %p148
      %p150 = scmp.ne.s32.totalorder %s141, %s142
      %p151 = scmp.eq.s32.totalorder %s21, 0
      %p152 = por %p150, %p151
      %p153 = scmp.ne.s32.totalorder %s141, %s142
      %p154 = scmp.eq.s32.totalorder %s22, 1
      %p155 = por %p153, %p154
      %p157 = scmp.ne.s32.totalorder %s142, %s156
      %p158 = scmp.eq.s32.totalorder %s22, 0
      %p159 = por %p157, %p158
      %s161 = sadd.s32 %s160, 1
      %p164 = scmp.eq.s32.totalorder %s16, 1
      %p165 = scmp.ne.s32.totalorder %s160, %s162
      %p166 = scmp.eq.s32.totalorder %s16, 0
      %p167 = por %p165, %p166
      %p168 = scmp.ne.s32.totalorder %s160, %s162
      %p169 = scmp.eq.s32.totalorder %s21, 1
      %p170 = por %p168, %p169
      %p171 = scmp.ne.s32.totalorder %s162, %s163
      %p172 = scmp.eq.s32.totalorder %s21, 0
      %p173 = por %p171, %p172
      %p174 = scmp.ne.s32.totalorder %s162, %s163
      %p175 = scmp.eq.s32.totalorder %s22, 1
      %p176 = por %p174, %p175
      %p178 = scmp.ne.s32.totalorder %s163, %s177
      %p179 = scmp.eq.s32.totalorder %s22, 0
      %p180 = por %p178, %p179
      %s182 = sadd.s32 %s181, 1
      %p185 = scmp.eq.s32.totalorder %s16, 1
      %p186 = scmp.ne.s32.totalorder %s181, %s183
      %p187 = scmp.eq.s32.totalorder %s16, 0
      %p188 = por %p186, %p187
      %p189 = scmp.ne.s32.totalorder %s181, %s183
      %p190 = scmp.eq.s32.totalorder %s21, 1
      %p191 = por %p189, %p190
      %p192 = scmp.ne.s32.totalorder %s183, %s184
      %p193 = scmp.eq.s32.totalorder %s21, 0
      %p194 = por %p192, %p193
      %p195 = scmp.ne.s32.totalorder %s183, %s184
      %p196 = scmp.eq.s32.totalorder %s22, 1
      %p197 = por %p195, %p196
      %p199 = scmp.ne.s32.totalorder %s184, %s198
      %p200 = scmp.eq.s32.totalorder %s22, 0
      %p201 = por %p199, %p200
      %s202 = ssub.s32 %s16, %s23
      %p203 = scmp.eq.s32.totalorder %s202, 0
      %s205 = sadd.s32 %s204, 1
      %s206 = scalar_select %p203, %s204, %s205
      %p209 = pneg %p203
      %p210 = scmp.eq.s32.totalorder %s16, 1
      %p211 = por %p209, %p210
      %p212 = scmp.ne.s32.totalorder %s204, %s207
      %p213 = scmp.eq.s32.totalorder %s16, 0
      %p214 = por %p212, %p213
      %p215 = scmp.ne.s32.totalorder %s204, %s207
      %p216 = scmp.eq.s32.totalorder %s21, 1
      %p217 = por %p215, %p216
      %p218 = scmp.ne.s32.totalorder %s207, %s208
      %p219 = scmp.eq.s32.totalorder %s21, 0
      %p220 = por %p218, %p219
      %p221 = scmp.ne.s32.totalorder %s207, %s208
      %p222 = scmp.eq.s32.totalorder %s22, 1
      %p223 = por %p221, %p222
      %p225 = scmp.ne.s32.totalorder %s208, %s224
      %p226 = scmp.eq.s32.totalorder %s22, 0
      %p227 = por %p225, %p226
      %p228 = scmp.le.s32.totalorder 1, %s16
      %p229 = scmp.lt.s32.totalorder %s16, 3
      %p230 = pnand %p228, %p229
      %p231 = pneg %p230
      // Predicated region
      $region9: #{ufln_forward.1} parent=5 // pred_check
        _
      $region10: #{ufln_forward.1} parent=5 // pred_check_branch
        %233 = sbr.rel (%p230) target = $region12
      $region11: #{ufln_forward.1} parent=5 // pred_region
        %s234 = ssub.s32 %s16, 1
        // Predicated region
        $region13: #{ufln_forward.1} parent=11 // pred_check
          %p235 = pneg %p89
        $region14: #{ufln_forward.1} parent=11 // pred_check_branch
          %237 = sbr.rel (%p235) target = $region16
        $region15: #{ufln_forward.1} parent=11 // pred_region
          _
        $region16: #{ufln_forward.1} parent=11 // pred_fallthru
          _
        // Predicated region
        $region17: #{ufln_forward.1} parent=11 // pred_check
          %p238 = pneg %p110
        $region18: #{ufln_forward.1} parent=11 // pred_check_branch
          %240 = sbr.rel (%p238) target = $region20
        $region19: #{ufln_forward.1} parent=11 // pred_region
          %s242 = ssub.s32 16, 16
          %243 = vsyncadd [#allocation3], %s242
          %s245 = sshll.u32 [#allocation2], 4
          %s246 = int_to_ptr.vmem [resolvable:$true] %s245
          %248 = dma.hbm_to_vmem [thread:$0]  %s3, 16, %s246, [#allocation3]
        $region20: #{ufln_forward.1} parent=11 // pred_fallthru
          _
        // Predicated region
        $region21: #{ufln_forward.1} parent=11 // pred_check
          %p249 = pneg %p131
        $region22: #{ufln_forward.1} parent=11 // pred_check_branch
          %251 = sbr.rel (%p249) target = $region24
        $region23: #{ufln_forward.1} parent=11 // pred_region
          _
        $region24: #{ufln_forward.1} parent=11 // pred_fallthru
          _
        // Predicated region
        $region25: #{ufln_forward.1} parent=11 // pred_check
          %p252 = pneg %p152
        $region26: #{ufln_forward.1} parent=11 // pred_check_branch
          %254 = sbr.rel (%p252) target = $region28
        $region27: #{ufln_forward.1} parent=11 // pred_region
          %s256 = ssub.s32 16, 16
          %257 = vsyncadd [#allocation5], %s256
          %s259 = sshll.u32 [#allocation4], 4
          %s260 = int_to_ptr.vmem [resolvable:$true] %s259
          %262 = dma.hbm_to_vmem [thread:$0]  %s5, 16, %s260, [#allocation5]
        $region28: #{ufln_forward.1} parent=11 // pred_fallthru
          _
        // Predicated region
        $region29: #{ufln_forward.1} parent=11 // pred_check
          %p263 = pneg %p173
        $region30: #{ufln_forward.1} parent=11 // pred_check_branch
          %265 = sbr.rel (%p263) target = $region32
        $region31: #{ufln_forward.1} parent=11 // pred_region
          _
        $region32: #{ufln_forward.1} parent=11 // pred_fallthru
          _
        // Predicated region
        $region33: #{ufln_forward.1} parent=11 // pred_check
          %p266 = pneg %p194
        $region34: #{ufln_forward.1} parent=11 // pred_check_branch
          %268 = sbr.rel (%p266) target = $region36
        $region35: #{ufln_forward.1} parent=11 // pred_region
          %s270 = ssub.s32 16, 16
          %271 = vsyncadd [#allocation5], %s270
          %s273 = sshll.u32 [#allocation6], 4
          %s274 = int_to_ptr.vmem [resolvable:$true] %s273
          %276 = dma.hbm_to_vmem [thread:$0]  %s7, 16, %s274, [#allocation5]
        $region36: #{ufln_forward.1} parent=11 // pred_fallthru
          _
      $region12: #{ufln_forward.1} parent=5 // pred_fallthru
        _
      %p277 = scmp.lt.s32.totalorder %s16, 2
      // Predicated region
      $region37: #{ufln_forward.1} parent=5 // pred_check
        %p278 = pneg %p277
      $region38: #{ufln_forward.1} parent=5 // pred_check_branch
        %280 = sbr.rel (%p278) target = $region40
      $region39: #{ufln_forward.1} parent=5 // pred_region
        // Predicated region
        $region41: #{ufln_forward.1} parent=39 // pred_check
          %p281 = pneg %p36
        $region42: #{ufln_forward.1} parent=39 // pred_check_branch
          %283 = sbr.rel (%p281) target = $region44
        $region43: #{ufln_forward.1} parent=39 // pred_region
          %p284 = scmp.lt.s32.totalorder %s16, 1
          %s285 = scalar_select %p284, %s16, 1
          %s286 = smul.addr %s285, 8
          %s287 = scalar_lea.vmem %s0, %s286
        $region44: #{ufln_forward.1} parent=39 // pred_fallthru
          _
        // Predicated region
        $region45: #{ufln_forward.1} parent=39 // pred_check
          %p288 = pneg %p62
        $region46: #{ufln_forward.1} parent=39 // pred_check_branch
          %290 = sbr.rel (%p288) target = $region48
        $region47: #{ufln_forward.1} parent=39 // pred_region
          %p291 = scmp.lt.s32.totalorder %s16, 1
          %s292 = scalar_select %p291, %s16, 1
          %s293 = smul.addr %s292, 8
          %s294 = scalar_lea.vmem %s1, %s293
        $region48: #{ufln_forward.1} parent=39 // pred_fallthru
          _
      $region40: #{ufln_forward.1} parent=5 // pred_fallthru
        _
      %p295 = scmp.le.s32.totalorder 1, %s16
      %p296 = scmp.lt.s32.totalorder %s16, 3
      %p297 = pnand %p295, %p296
      %p298 = pneg %p297
      // Predicated region
      $region49: #{ufln_forward.1} parent=5 // pred_check
        _
      $region50: #{ufln_forward.1} parent=5 // pred_check_branch
        %300 = sbr.rel (%p297) target = $region52
      $region51: #{ufln_forward.1} parent=5 // pred_region
        %s301 = ssub.s32 %s16, 1
        // Predicated region
        $region53: #{ufln_forward.1} parent=51 // pred_check
          %p302 = pneg %p110
        $region54: #{ufln_forward.1} parent=51 // pred_check_branch
          %304 = sbr.rel (%p302) target = $region56
        $region55: #{ufln_forward.1} parent=51 // pred_region
          %305 = dma.done [#allocation3], 16
        $region56: #{ufln_forward.1} parent=51 // pred_fallthru
          _
        // Predicated region
        $region57: #{ufln_forward.1} parent=51 // pred_check
          %p306 = pneg %p152
        $region58: #{ufln_forward.1} parent=51 // pred_check_branch
          %308 = sbr.rel (%p306) target = $region60
        $region59: #{ufln_forward.1} parent=51 // pred_region
          %309 = dma.done [#allocation5], 16
        $region60: #{ufln_forward.1} parent=51 // pred_fallthru
          _
        // Predicated region
        $region61: #{ufln_forward.1} parent=51 // pred_check
          %p310 = pneg %p194
        $region62: #{ufln_forward.1} parent=51 // pred_check_branch
          %312 = sbr.rel (%p310) target = $region64
        $region63: #{ufln_forward.1} parent=51 // pred_region
          %313 = dma.done [#allocation5], 16
        $region64: #{ufln_forward.1} parent=51 // pred_fallthru
          _
        %p314 = scmp.lt.s32.totalorder %s21, 1
        %s315 = scalar_select %p314, %s21, 1
        %s316 = smul.addr %s315, 8
        %s317 = scalar_lea.vmem %s0, %s316
        %p318 = pneg %p42
        %p319 = pneg %p39
        %p320 = scmp.lt.s32.totalorder %s21, 1
        %s321 = scalar_select %p320, %s21, 1
        %s322 = smul.addr %s321, 8
        %s323 = scalar_lea.vmem %s1, %s322
        %p324 = pneg %p68
        %p325 = pneg %p65
        %p326 = pneg %p89
        %p327 = pneg %p86
        %p328 = pneg %p110
        %p329 = pneg %p107
        %p330 = pneg %p131
        %p331 = pneg %p128
        %p332 = pneg %p152
        %p333 = pneg %p149
        %p334 = pneg %p173
        %p335 = pneg %p170
        %p336 = pneg %p194
        %p337 = pneg %p191
        %p338 = pneg %p220
        %p339 = pneg %p217
        %p340 = scmp.lt.s32.totalorder %s21, 1
        %s341 = scalar_select %p340, %s21, 1
        %s342 = smul.addr %s341, 8
        %s343 = scalar_lea.vmem %s8, %s342
        %p344 = scmp.lt.s32.totalorder %s21, 1
        %s345 = scalar_select %p344, %s21, 1
        %s346 = smul.addr %s345, 8
        %s347 = scalar_lea.vmem %s0, %s346
        %p348 = scmp.lt.s32.totalorder %s21, 1
        %s349 = scalar_select %p348, %s21, 1
        %s350 = smul.addr %s349, 8
        %s351 = scalar_lea.vmem %s1, %s350
        %p352 = scmp.lt.s32.totalorder %s21, 1
        %s353 = scalar_select %p352, %s21, 1
        %s354 = smul.addr %s353, 8
        %s355 = scalar_lea.vmem %s8, %s354
        %v356 = vld [vmem:[%s347] sm:$0xff]
        %v357 = vld [vmem:[%s351] sm:$0xff]
        %v358 = vld [vmem:[%s2] sm:$0xff]
        %v359 = vld [vmem:[%s2 + $0x8] sm:$0xff]
        %vm360 = vcmask 130048
        %v362 = vsel %vm360, %v356, 0
        %364 = vmatprep.subr.mxu0 0.0
        %365 = vmatpush1.msra.mxu0 0.0
        %366 = vmatprep.subr.mxu0 0.0
        %367 = vmatpush1.msra.mxu0 0.0
        %368 = vmatprep.subr.mxu0 0.0
        %369 = vmatpush1.msra.mxu0 0.0
        %370 = vmatprep.subr.mxu0 0.0
        %371 = vmatpush1.msra.mxu0 0.0
        %372 = vmatprep.subr.mxu0 0.0
        %373 = vmatpush1.msra.mxu0 0.0
        %374 = vmatprep.subr.mxu0 0.0
        %375 = vmatpush1.msra.mxu0 0.0
        %376 = vmatprep.subr.mxu0 0.0
        %377 = vmatpush1.msra.mxu0 0.0
        %378 = vmatprep.subr.mxu0 0.0
        %379 = vmatpush1.msra.mxu0 0.0
        %380 = vmatprep.subr.mxu0 0.0
        %381 = vmatpush1.msra.mxu0 0.0
        %382 = vmatprep.subr.mxu0 0.0
        %383 = vmatpush1.msra.mxu0 0.0
        %384 = vmatprep.subr.mxu0 0.0
        %385 = vmatpush1.msra.mxu0 0.0
        %386 = vmatprep.subr.mxu0 0.0
        %387 = vmatpush1.msra.mxu0 0.0
        %388 = vmatprep.subr.mxu0 0.0
        %389 = vmatpush1.msra.mxu0 0.0
        %390 = vmatprep.subr.mxu0 0.0
        %391 = vmatpush1.msra.mxu0 0.0
        %392 = vmatprep.subr.mxu0 0.0
        %393 = vmatpush1.msra.mxu0 %v359
        %394 = vmatprep.subr.mxu0 0.0
        %395 = vmatpush1.msra.mxu0 %v358
        %396 = vmatprep.subr.mxu0 0.0
        %397 = vmatpush2.msra.mxu0 0.0
        %398 = vmatprep.subr.mxu0 0.0
        %399 = vmatpush2.msra.mxu0 0.0
        %400 = vmatprep.subr.mxu0 0.0
        %401 = vmatpush2.msra.mxu0 0.0
        %402 = vmatprep.subr.mxu0 0.0
        %403 = vmatpush2.msra.mxu0 0.0
        %404 = vmatprep.subr.mxu0 0.0
        %405 = vmatpush2.msra.mxu0 0.0
        %406 = vmatprep.subr.mxu0 0.0
        %407 = vmatpush2.msra.mxu0 0.0
        %408 = vmatprep.subr.mxu0 0.0
        %409 = vmatpush2.msra.mxu0 0.0
        %410 = vmatprep.subr.mxu0 0.0
        %411 = vmatpush2.msra.mxu0 0.0
        %412 = vmatprep.subr.mxu0 0.0
        %413 = vmatpush2.msra.mxu0 0.0
        %414 = vmatprep.subr.mxu0 0.0
        %415 = vmatpush2.msra.mxu0 0.0
        %416 = vmatprep.subr.mxu0 0.0
        %417 = vmatpush2.msra.mxu0 0.0
        %418 = vmatprep.subr.mxu0 0.0
        %419 = vmatpush2.msra.mxu0 0.0
        %420 = vmatprep.subr.mxu0 0.0
        %421 = vmatpush2.msra.mxu0 0.0
        %422 = vmatprep.subr.mxu0 0.0
        %423 = vmatpush2.msra.mxu0 0.0
        %424 = vmatprep.subr.mxu0 0.0
        %425 = vmatpush2.msra.mxu0 0.0
        %426 = vmatprep.subr.mxu0 0.0
        %427 = vmatpush2.msra.mxu0 0.0
        %428 = vmatprep.mubr.f32.mxu0 0.0
        %429 = vmatmul.mubr.f32.gmra.mxu0 %v362
        %v430 = vpop.f32.mrf.mxu0
        %v431 = vadd.f32 0.0, %v430
        %v432 = vpop.f32.mrf.mxu0
        %433 = vdwg.mxu0
        %v434 = vld [vmem:[#allocation2] sm:$0x1]
        %v436 = vlaneseq
        %v437 = vshrl.u32 %v436, 7
        %v438 = vsub.s32 0, %v437
        %v439 = vrot.slane %v434, %v438
        %vm441 = vcmask 64512
        %v443 = vsel %vm441, %v357, 0
        %445 = vmatprep.subr.mxu0 0.0
        %446 = vmatpush1.msra.mxu0 0.0
        %447 = vmatprep.subr.mxu0 0.0
        %448 = vmatpush1.msra.mxu0 0.0
        %449 = vmatprep.subr.mxu0 0.0
        %450 = vmatpush1.msra.mxu0 0.0
        %451 = vmatprep.subr.mxu0 0.0
        %452 = vmatpush1.msra.mxu0 0.0
        %453 = vmatprep.subr.mxu0 0.0
        %454 = vmatpush1.msra.mxu0 0.0
        %455 = vmatprep.subr.mxu0 0.0
        %456 = vmatpush1.msra.mxu0 0.0
        %457 = vmatprep.subr.mxu0 0.0
        %458 = vmatpush1.msra.mxu0 0.0
        %459 = vmatprep.subr.mxu0 0.0
        %460 = vmatpush1.msra.mxu0 0.0
        %461 = vmatprep.subr.mxu0 0.0
        %462 = vmatpush1.msra.mxu0 0.0
        %463 = vmatprep.subr.mxu0 0.0
        %464 = vmatpush1.msra.mxu0 0.0
        %465 = vmatprep.subr.mxu0 0.0
        %466 = vmatpush1.msra.mxu0 0.0
        %467 = vmatprep.subr.mxu0 0.0
        %468 = vmatpush1.msra.mxu0 0.0
        %469 = vmatprep.subr.mxu0 0.0
        %470 = vmatpush1.msra.mxu0 0.0
        %471 = vmatprep.subr.mxu0 0.0
        %472 = vmatpush1.msra.mxu0 0.0
        %473 = vmatprep.subr.mxu0 0.0
        %474 = vmatpush1.msra.mxu0 0.0
        %475 = vmatprep.subr.mxu0 0.0
        %476 = vmatpush1.msra.mxu0 %v431
        %477 = vmatprep.subr.mxu0 0.0
        %478 = vmatpush2.msra.mxu0 0.0
        %479 = vmatprep.subr.mxu0 0.0
        %480 = vmatpush2.msra.mxu0 0.0
        %481 = vmatprep.subr.mxu0 0.0
        %482 = vmatpush2.msra.mxu0 0.0
        %483 = vmatprep.subr.mxu0 0.0
        %484 = vmatpush2.msra.mxu0 0.0
        %485 = vmatprep.subr.mxu0 0.0
        %486 = vmatpush2.msra.mxu0 0.0
        %487 = vmatprep.subr.mxu0 0.0
        %488 = vmatpush2.msra.mxu0 0.0
        %489 = vmatprep.subr.mxu0 0.0
        %490 = vmatpush2.msra.mxu0 0.0
        %491 = vmatprep.subr.mxu0 0.0
        %492 = vmatpush2.msra.mxu0 0.0
        %493 = vmatprep.subr.mxu0 0.0
        %494 = vmatpush2.msra.mxu0 0.0
        %495 = vmatprep.subr.mxu0 0.0
        %496 = vmatpush2.msra.mxu0 0.0
        %497 = vmatprep.subr.mxu0 0.0
        %498 = vmatpush2.msra.mxu0 0.0
        %499 = vmatprep.subr.mxu0 0.0
        %500 = vmatpush2.msra.mxu0 0.0
        %501 = vmatprep.subr.mxu0 0.0
        %502 = vmatpush2.msra.mxu0 0.0
        %503 = vmatprep.subr.mxu0 0.0
        %504 = vmatpush2.msra.mxu0 0.0
        %505 = vmatprep.subr.mxu0 0.0
        %506 = vmatpush2.msra.mxu0 0.0
        %507 = vmatprep.subr.mxu0 0.0
        %508 = vmatpush2.msra.mxu0 0.0
        %509 = vmatprep.mubr.f32.mxu0 0.0
        %510 = vmatmul.mubr.f32.gmra.mxu0 %v443
        %v511 = vpop.f32.mrf.mxu0
        %v512 = vadd.f32 %v439, %v511
        %v513 = vpop.f32.mrf.mxu0
        %514 = vdwg.mxu0
        %v515 = vxor.u32 %v512, 2147483648
        %v516 = vmul.f32 %v515, 1.442695
        %v517 = vpow.pop %v516
        %v518 = vadd.f32 %v517, 1.0
        %v519 = vrcp.pop %v518
        %v520 = vmul.f32 1.0, %v519
        %522 = vrot.lane.b32.xlu0 %v520, 120
        %v523 = vpop.permute.xlu0 %522
        %vm525 = vcmask 97280
        %v526 = vsel %vm525, %v523, 0.0
        %527 = vadd.xlane.f32.xlu0 %v526
        %v528 = vpop.xlane.xlu0 %527
        %v529 = vrcp.pop 12.0
        %v530 = vmul.f32 %v528, %v529
        %v531 = vlaneseq
        %v532 = vand.u32 %v531, 127
        %vm533 = vcmp.lt.s32.totalorder %v532, 20
        %v534 = vsel %vm533, 1.0, %v530
        %v535 = vmul.f32 %v520, %v534
        %v536 = vld [vmem:[%s4] sm:$0xff]
        %v537 = vld [vmem:[%s4 + $0x8] sm:$0xff]
        %v538 = vld [vmem:[%s4 + $0x10] sm:$0xff]
        %v539 = vld [vmem:[%s4 + $0x18] sm:$0xff]
        %v540 = vld [vmem:[%s4 + $0x20] sm:$0xf]
        %vm541 = vcmask 293888
        %v543 = vsel %vm541, %v535, 0
        %vm545 = vcmask 1043456
        %v547 = vsel %vm545, %v540, 0
        %549 = vmatprep.subr.mxu0 0.0
        %550 = vmatpush1.msra.mxu0 0.0
        %551 = vmatprep.subr.mxu0 0.0
        %552 = vmatpush1.msra.mxu0 0.0
        %553 = vmatprep.subr.mxu0 0.0
        %554 = vmatpush1.msra.mxu0 0.0
        %555 = vmatprep.subr.mxu0 0.0
        %556 = vmatpush1.msra.mxu0 0.0
        %557 = vmatprep.subr.mxu0 0.0
        %558 = vmatpush1.msra.mxu0 0.0
        %559 = vmatprep.subr.mxu0 0.0
        %560 = vmatpush1.msra.mxu0 0.0
        %561 = vmatprep.subr.mxu0 0.0
        %562 = vmatpush1.msra.mxu0 0.0
        %563 = vmatprep.subr.mxu0 0.0
        %564 = vmatpush1.msra.mxu0 0.0
        %565 = vmatprep.subr.mxu0 0.0
        %566 = vmatpush1.msra.mxu0 0.0
        %567 = vmatprep.subr.mxu0 0.0
        %568 = vmatpush1.msra.mxu0 0.0
        %569 = vmatprep.subr.mxu0 0.0
        %570 = vmatpush1.msra.mxu0 0.0
        %571 = vmatprep.subr.mxu0 0.0
        %572 = vmatpush1.msra.mxu0 %v547
        %573 = vmatprep.subr.mxu0 0.0
        %574 = vmatpush1.msra.mxu0 %v539
        %575 = vmatprep.subr.mxu0 0.0
        %576 = vmatpush1.msra.mxu0 %v538
        %577 = vmatprep.subr.mxu0 0.0
        %578 = vmatpush1.msra.mxu0 %v537
        %579 = vmatprep.subr.mxu0 0.0
        %580 = vmatpush1.msra.mxu0 %v536
        %581 = vmatprep.subr.mxu0 0.0
        %582 = vmatpush2.msra.mxu0 0.0
        %583 = vmatprep.subr.mxu0 0.0
        %584 = vmatpush2.msra.mxu0 0.0
        %585 = vmatprep.subr.mxu0 0.0
        %586 = vmatpush2.msra.mxu0 0.0
        %587 = vmatprep.subr.mxu0 0.0
        %588 = vmatpush2.msra.mxu0 0.0
        %589 = vmatprep.subr.mxu0 0.0
        %590 = vmatpush2.msra.mxu0 0.0
        %591 = vmatprep.subr.mxu0 0.0
        %592 = vmatpush2.msra.mxu0 0.0
        %593 = vmatprep.subr.mxu0 0.0
        %594 = vmatpush2.msra.mxu0 0.0
        %595 = vmatprep.subr.mxu0 0.0
        %596 = vmatpush2.msra.mxu0 0.0
        %597 = vmatprep.subr.mxu0 0.0
        %598 = vmatpush2.msra.mxu0 0.0
        %599 = vmatprep.subr.mxu0 0.0
        %600 = vmatpush2.msra.mxu0 0.0
        %601 = vmatprep.subr.mxu0 0.0
        %602 = vmatpush2.msra.mxu0 0.0
        %603 = vmatprep.subr.mxu0 0.0
        %604 = vmatpush2.msra.mxu0 0.0
        %605 = vmatprep.subr.mxu0 0.0
        %606 = vmatpush2.msra.mxu0 0.0
        %607 = vmatprep.subr.mxu0 0.0
        %608 = vmatpush2.msra.mxu0 0.0
        %609 = vmatprep.subr.mxu0 0.0
        %610 = vmatpush2.msra.mxu0 0.0
        %611 = vmatprep.subr.mxu0 0.0
        %612 = vmatpush2.msra.mxu0 0.0
        %613 = vmatprep.mubr.f32.mxu0 0.0
        %614 = vmatmul.mubr.f32.gmra.mxu0 %v543
        %v615 = vpop.f32.mrf.mxu0
        %v616 = vadd.f32 0.0, %v615
        %v617 = vpop.f32.mrf.mxu0
        %618 = vdwg.mxu0
        %v619 = vld [vmem:[#allocation4] sm:$0x1]
        %v621 = vlaneseq
        %v622 = vshrl.u32 %v621, 7
        %v623 = vsub.s32 0, %v622
        %v624 = vrot.slane %v619, %v623
        %626 = vmatprep.subr.mxu0 0.0
        %627 = vmatpush1.msra.mxu0 0.0
        %628 = vmatprep.subr.mxu0 0.0
        %629 = vmatpush1.msra.mxu0 0.0
        %630 = vmatprep.subr.mxu0 0.0
        %631 = vmatpush1.msra.mxu0 0.0
        %632 = vmatprep.subr.mxu0 0.0
        %633 = vmatpush1.msra.mxu0 0.0
        %634 = vmatprep.subr.mxu0 0.0
        %635 = vmatpush1.msra.mxu0 0.0
        %636 = vmatprep.subr.mxu0 0.0
        %637 = vmatpush1.msra.mxu0 0.0
        %638 = vmatprep.subr.mxu0 0.0
        %639 = vmatpush1.msra.mxu0 0.0
        %640 = vmatprep.subr.mxu0 0.0
        %641 = vmatpush1.msra.mxu0 0.0
        %642 = vmatprep.subr.mxu0 0.0
        %643 = vmatpush1.msra.mxu0 0.0
        %644 = vmatprep.subr.mxu0 0.0
        %645 = vmatpush1.msra.mxu0 0.0
        %646 = vmatprep.subr.mxu0 0.0
        %647 = vmatpush1.msra.mxu0 0.0
        %648 = vmatprep.subr.mxu0 0.0
        %649 = vmatpush1.msra.mxu0 0.0
        %650 = vmatprep.subr.mxu0 0.0
        %651 = vmatpush1.msra.mxu0 0.0
        %652 = vmatprep.subr.mxu0 0.0
        %653 = vmatpush1.msra.mxu0 0.0
        %654 = vmatprep.subr.mxu0 0.0
        %655 = vmatpush1.msra.mxu0 0.0
        %656 = vmatprep.subr.mxu0 0.0
        %657 = vmatpush1.msra.mxu0 %v616
        %658 = vmatprep.subr.mxu0 0.0
        %659 = vmatpush2.msra.mxu0 0.0
        %660 = vmatprep.subr.mxu0 0.0
        %661 = vmatpush2.msra.mxu0 0.0
        %662 = vmatprep.subr.mxu0 0.0
        %663 = vmatpush2.msra.mxu0 0.0
        %664 = vmatprep.subr.mxu0 0.0
        %665 = vmatpush2.msra.mxu0 0.0
        %666 = vmatprep.subr.mxu0 0.0
        %667 = vmatpush2.msra.mxu0 0.0
        %668 = vmatprep.subr.mxu0 0.0
        %669 = vmatpush2.msra.mxu0 0.0
        %670 = vmatprep.subr.mxu0 0.0
        %671 = vmatpush2.msra.mxu0 0.0
        %672 = vmatprep.subr.mxu0 0.0
        %673 = vmatpush2.msra.mxu0 0.0
        %674 = vmatprep.subr.mxu0 0.0
        %675 = vmatpush2.msra.mxu0 0.0
        %676 = vmatprep.subr.mxu0 0.0
        %677 = vmatpush2.msra.mxu0 0.0
        %678 = vmatprep.subr.mxu0 0.0
        %679 = vmatpush2.msra.mxu0 0.0
        %680 = vmatprep.subr.mxu0 0.0
        %681 = vmatpush2.msra.mxu0 0.0
        %682 = vmatprep.subr.mxu0 0.0
        %683 = vmatpush2.msra.mxu0 0.0
        %684 = vmatprep.subr.mxu0 0.0
        %685 = vmatpush2.msra.mxu0 0.0
        %686 = vmatprep.subr.mxu0 0.0
        %687 = vmatpush2.msra.mxu0 0.0
        %688 = vmatprep.subr.mxu0 0.0
        %689 = vmatpush2.msra.mxu0 0.0
        %690 = vmatprep.mubr.f32.mxu0 0.0
        %691 = vmatmul.mubr.f32.gmra.mxu0 %v443
        %v692 = vpop.f32.mrf.mxu0
        %v693 = vadd.f32 %v624, %v692
        %v694 = vpop.f32.mrf.mxu0
        %695 = vdwg.mxu0
        %v696 = vld [vmem:[%s6] sm:$0xff]
        %v697 = vld [vmem:[%s6 + $0x8] sm:$0xff]
        %v698 = vld [vmem:[#allocation6] sm:$0x1]
        %v700 = vlaneseq
        %v701 = vshrl.u32 %v700, 7
        %v702 = vsub.s32 0, %v701
        %v703 = vrot.slane %v698, %v702
        %706 = vrot.lane.b32.xlu0 %v693, 108
        %v707 = vpop.permute.xlu0 %706
        %v708 = vsel %vm360, %v707, 0
        %710 = vmatprep.subr.mxu0 0.0
        %711 = vmatpush1.msra.mxu0 0.0
        %712 = vmatprep.subr.mxu0 0.0
        %713 = vmatpush1.msra.mxu0 0.0
        %714 = vmatprep.subr.mxu0 0.0
        %715 = vmatpush1.msra.mxu0 0.0
        %716 = vmatprep.subr.mxu0 0.0
        %717 = vmatpush1.msra.mxu0 0.0
        %718 = vmatprep.subr.mxu0 0.0
        %719 = vmatpush1.msra.mxu0 0.0
        %720 = vmatprep.subr.mxu0 0.0
        %721 = vmatpush1.msra.mxu0 0.0
        %722 = vmatprep.subr.mxu0 0.0
        %723 = vmatpush1.msra.mxu0 0.0
        %724 = vmatprep.subr.mxu0 0.0
        %725 = vmatpush1.msra.mxu0 0.0
        %726 = vmatprep.subr.mxu0 0.0
        %727 = vmatpush1.msra.mxu0 0.0
        %728 = vmatprep.subr.mxu0 0.0
        %729 = vmatpush1.msra.mxu0 0.0
        %730 = vmatprep.subr.mxu0 0.0
        %731 = vmatpush1.msra.mxu0 0.0
        %732 = vmatprep.subr.mxu0 0.0
        %733 = vmatpush1.msra.mxu0 0.0
        %734 = vmatprep.subr.mxu0 0.0
        %735 = vmatpush1.msra.mxu0 0.0
        %736 = vmatprep.subr.mxu0 0.0
        %737 = vmatpush1.msra.mxu0 0.0
        %738 = vmatprep.subr.mxu0 0.0
        %739 = vmatpush1.msra.mxu0 %v697
        %740 = vmatprep.subr.mxu0 0.0
        %741 = vmatpush1.msra.mxu0 %v696
        %742 = vmatprep.subr.mxu0 0.0
        %743 = vmatpush2.msra.mxu0 0.0
        %744 = vmatprep.subr.mxu0 0.0
        %745 = vmatpush2.msra.mxu0 0.0
        %746 = vmatprep.subr.mxu0 0.0
        %747 = vmatpush2.msra.mxu0 0.0
        %748 = vmatprep.subr.mxu0 0.0
        %749 = vmatpush2.msra.mxu0 0.0
        %750 = vmatprep.subr.mxu0 0.0
        %751 = vmatpush2.msra.mxu0 0.0
        %752 = vmatprep.subr.mxu0 0.0
        %753 = vmatpush2.msra.mxu0 0.0
        %754 = vmatprep.subr.mxu0 0.0
        %755 = vmatpush2.msra.mxu0 0.0
        %756 = vmatprep.subr.mxu0 0.0
        %757 = vmatpush2.msra.mxu0 0.0
        %758 = vmatprep.subr.mxu0 0.0
        %759 = vmatpush2.msra.mxu0 0.0
        %760 = vmatprep.subr.mxu0 0.0
        %761 = vmatpush2.msra.mxu0 0.0
        %762 = vmatprep.subr.mxu0 0.0
        %763 = vmatpush2.msra.mxu0 0.0
        %764 = vmatprep.subr.mxu0 0.0
        %765 = vmatpush2.msra.mxu0 0.0
        %766 = vmatprep.subr.mxu0 0.0
        %767 = vmatpush2.msra.mxu0 0.0
        %768 = vmatprep.subr.mxu0 0.0
        %769 = vmatpush2.msra.mxu0 0.0
        %770 = vmatprep.subr.mxu0 0.0
        %771 = vmatpush2.msra.mxu0 0.0
        %772 = vmatprep.subr.mxu0 0.0
        %773 = vmatpush2.msra.mxu0 0.0
        %774 = vmatprep.mubr.f32.mxu0 0.0
        %775 = vmatmul.mubr.f32.gmra.mxu0 %v708
        %v776 = vpop.f32.mrf.mxu0
        %v777 = vadd.f32 %v703, %v776
        %v778 = vpop.f32.mrf.mxu0
        %779 = vdwg.mxu0
        %vm780 = vcmp.ge.f32.partialorder %v777, 0.0
        %v781 = vmul.f32 %v777, 0.01
        %v782 = vsel %vm780, %v777, %v781
        %v783 = vadd.f32 %v782, %v693
        %v784 = vmul.f32 %v783, 0.5
        %v785 = vsel %vm541, %v535, 0.0
        %786 = vadd.xlane.f32.xlu0 %v785
        %v787 = vpop.xlane.xlu0 %786
        %v788 = vrcp.pop 36.0
        %v789 = vmul.f32 %v787, %v788
        %v790 = vmul.f32 %v789, %v535
        %v791 = vadd.f32 %v790, %v535
        %793 = vrot.lane.b32.xlu0 %v791, 36
        %v794 = vpop.permute.xlu0 %793
        %797 = vrot.lane.b32.xlu0 %v784, 72
        %v798 = vpop.permute.xlu0 %797
        %800 = vrot.lane.b32.xlu0 %v693, 72
        %v801 = vpop.permute.xlu0 %800
        %804 = vrot.lane.b32.xlu0 %v782, 108
        %v805 = vpop.permute.xlu0 %804
        %v807 = vsel %vm541, %v535, %v794
        %vm808 = vcmask 588800
        %v809 = vsel %vm808, %v807, %v798
        %vm810 = vcmask 752640
        %v811 = vsel %vm810, %v809, %v801
        %vm812 = vcmask 883712
        %v813 = vsel %vm812, %v811, %v805
        %814 = vst [vmem:[%s355] sm:$0xff] %v813
        %p815 = scmp.lt.s32.totalorder %s21, 1
        %s816 = scalar_select %p815, %s21, 1
        %s817 = smul.addr %s816, 8
        %s818 = scalar_lea.vmem %s8, %s817
        // Predicated region
        $region65: #{ufln_forward.1} parent=51 // pred_check
          %p819 = pneg %p217
        $region66: #{ufln_forward.1} parent=51 // pred_check_branch
          %821 = sbr.rel (%p819) target = $region68
        $region67: #{ufln_forward.1} parent=51 // pred_region
          _
        $region68: #{ufln_forward.1} parent=51 // pred_fallthru
          _
      $region52: #{ufln_forward.1} parent=5 // pred_fallthru
        _
      %p822 = scmp.le.s32.totalorder 2, %s16
      // Predicated region
      $region69: #{ufln_forward.1} parent=5 // pred_check
        %p823 = pneg %p822
      $region70: #{ufln_forward.1} parent=5 // pred_check_branch
        %825 = sbr.rel (%p823) target = $region72
      $region71: #{ufln_forward.1} parent=5 // pred_region
        %s826 = ssub.s32 %s16, 2
        // Predicated region
        $region73: #{ufln_forward.1} parent=71 // pred_check
          %p827 = pneg %p223
        $region74: #{ufln_forward.1} parent=71 // pred_check_branch
          %829 = sbr.rel (%p827) target = $region76
        $region75: #{ufln_forward.1} parent=71 // pred_region
          %p830 = scmp.lt.s32.totalorder %s22, 1
          %s831 = scalar_select %p830, %s22, 1
          %s832 = smul.addr %s831, 8
          %s833 = scalar_lea.vmem %s8, %s832
        $region76: #{ufln_forward.1} parent=71 // pred_fallthru
          _
      $region72: #{ufln_forward.1} parent=5 // pred_fallthru
        _
    $region6: #{ufln_forward.1} parent=1 // loop_footer
      %s20 = sadd.s32 1, %s16
    $region7: #{ufln_forward.1} parent=1 // loop_footer_branch
      %15 = sbr.rel target = $region3
    $region8: #{ufln_forward.1} parent=1 // loop_exit
      _
    %834 = vsyncpa [#allocation3], 1
    %s835 = scalar_lea.sflag [#allocation3], 1
    %836 = vsyncpa %s835, 1
    %837 = vsyncpa [#allocation5], 1

</llo_original>
